<compile_context>
chip_gen: v5e
topology: v5e:2x2
jax: 0.10.0
libtpu: 0.0.40
codegen_flags: <defaults>
</compile_context>

<pallas_src>
import functools

import jax
import jax.numpy as jnp
from jax.experimental import pallas as pl
from jax.experimental.pallas import tpu as pltpu


def _se_fusion_kernel(x_ref, w1t_ref, b1_ref, w2t_ref, b2_ref, o_ref, acc_ref,
                      *, n_inputs, channels_last):
    """Grid = (B_tiles, n_inputs); n (the merge-sum reduction) is innermost.

    x_ref  : [1, TB, C, HW] (or [1, TB, HW, C] if channels_last), input dtype
    w1t_ref: [n, C, Cr]   resident full array (f32)
    b1_ref : [n, 1, Cr]
    w2t_ref: [n, Cr, C]
    b2_ref : [n, 1, C]
    o_ref  : [TB, C, HW] (or [TB, HW, C]), input dtype, written on last step
    acc_ref: f32 VMEM scratch, same shape as the output block
    """
    i = pl.program_id(1)                       # which fusion input (reduction)

    x = x_ref[0].astype(jnp.float32)           # [TB, C, HW] / [TB, HW, C]

    # Squeeze: global average pool over spatial.
    if channels_last:
        s = jnp.mean(x, axis=1)                # [TB, C]
    else:
        s = jnp.mean(x, axis=-1)               # [TB, C]

    # Excitation MLP (C -> C//4 -> C), per-branch params read from resident VMEM.
    h = jnp.dot(s, w1t_ref[i], preferred_element_type=jnp.float32) + b1_ref[i]
    h = jnp.maximum(h, 0.0)                    # [TB, Cr]
    g = jnp.dot(h, w2t_ref[i], preferred_element_type=jnp.float32) + b2_ref[i]
    g = jax.nn.sigmoid(g)                      # [TB, C]

    if channels_last:
        y = x * g[:, None, :]
    else:
        y = x * g[:, :, None]

    # merge='add' accumulation in f32 scratch; no zero-init pass.
    @pl.when(i == 0)
    def _first():
        acc_ref[...] = y

    @pl.when(i > 0)
    def _accum():
        acc_ref[...] += y

    @pl.when(i == n_inputs - 1)
    def _store():
        o_ref[...] = acc_ref[...].astype(o_ref.dtype)


def fusion_module_forward(xs, w1, b1, w2, b2, *, block_b=None,
                          vmem_budget_bytes=28 * 1024 * 1024):
    """xs: [n_inputs, B, C, H, W] (stacked NCHW inputs, native dtype).
    w1: [n, Cr, C], b1: [n, Cr], w2: [n, C, Cr], b2: [n, C] (PyTorch Linear layout).
    Returns [B, C, H, W] in the input dtype."""
    n, B, C, H, W = xs.shape
    Cr = w1.shape[1]
    HW = H * W
    in_dtype = xs.dtype
    out_dtype = xs.dtype

    # Lane-dense layout: put channels on lanes only when that is the 128-multiple.
    channels_last = (C % 128 == 0) and (HW % 128 != 0)

    x = xs.reshape(n, B, C, HW)                # no dtype change (no extra HBM pass)
    if channels_last:
        x = jnp.transpose(x, (0, 1, 3, 2))     # [n, B, HW, C]
        fm_shape = (HW, C)
    else:
        fm_shape = (C, HW)

    # Tiny SE parameters, pre-transposed for s @ W^T; VMEM-resident (f32).
    w1t = jnp.transpose(w1, (0, 2, 1)).astype(jnp.float32)   # [n, C, Cr]
    w2t = jnp.transpose(w2, (0, 2, 1)).astype(jnp.float32)   # [n, Cr, C]
    b1r = b1.reshape(n, 1, Cr).astype(jnp.float32)
    b2r = b2.reshape(n, 1, C).astype(jnp.float32)

    # Batch tile: 2x double-buffered input + f32 accumulator + 2x output per tile.
    in_isz = jnp.dtype(in_dtype).itemsize
    out_isz = jnp.dtype(out_dtype).itemsize
    per_b = C * HW * (2 * in_isz + 4 + 2 * out_isz)
    if block_b is None:
        block_b = max(1, min(B, vmem_budget_bytes // max(per_b, 1)))
        while B % block_b != 0:
            block_b -= 1
    TB = block_b
    assert B % TB == 0

    w_bytes = 4 * n * (C * Cr + Cr + Cr * C + C)
    need = TB * per_b + 2 * w_bytes + (2 << 20)
    vmem_limit = int(min(max(need, 16 << 20), 60 << 20))   # stays under v7x 64 MiB

    kernel = functools.partial(_se_fusion_kernel, n_inputs=n,
                               channels_last=channels_last)

    out = pl.pallas_call(
        kernel,
        out_shape=jax.ShapeDtypeStruct((B,) + fm_shape, out_dtype),
        grid_spec=pltpu.PrefetchScalarGridSpec(
            num_scalar_prefetch=0,
            grid=(B // TB, n),                 # reduction axis (n) is innermost
            in_specs=[
                pl.BlockSpec((1, TB) + fm_shape, lambda b, i: (i, b, 0, 0)),
                pl.BlockSpec((n, C, Cr), lambda b, i: (0, 0, 0)),   # resident
                pl.BlockSpec((n, 1, Cr), lambda b, i: (0, 0, 0)),
                pl.BlockSpec((n, Cr, C), lambda b, i: (0, 0, 0)),
                pl.BlockSpec((n, 1, C), lambda b, i: (0, 0, 0)),
            ],
            out_specs=pl.BlockSpec((TB,) + fm_shape, lambda b, i: (b, 0, 0)),
            scratch_shapes=[pltpu.VMEM((TB,) + fm_shape, jnp.float32)],
        ),
        compiler_params=pltpu.CompilerParams(
            dimension_semantics=("parallel", "arbitrary"),
            vmem_limit_bytes=vmem_limit,
        ),
    )(x, w1t, b1r, w2t, b2r)

    if channels_last:
        out = jnp.transpose(out, (0, 2, 1))
    return out.reshape(B, C, H, W)


def fusion_module_ref(xs, w1, b1, w2, b2):
    """Pure-JAX reference matching the PyTorch FusionModule (merge='add')."""
    xf = xs.astype(jnp.float32)
    s = jnp.mean(xf, axis=(-2, -1))                                   # [n, B, C]
    h = jax.nn.relu(jnp.einsum('nbc,nrc->nbr', s, w1) + b1[:, None])  # [n, B, Cr]
    g = jax.nn.sigmoid(jnp.einsum('nbr,ncr->nbc', h, w2) + b2[:, None])
    return jnp.sum(xf * g[:, :, :, None, None], axis=0)


if __name__ == "__main__":
    # Small shapes consistent with the module: n_inputs SE branches over NCHW.
    n_inputs, B, C, H, W = 2, 2, 4, 16, 16
    ratio = 4
    Cr = max(C // ratio, 1)

    key = jax.random.PRNGKey(0)
    kx, k1, k2, k3, k4 = jax.random.split(key, 5)

    # Stacked inputs: the PyTorch forward receives a list of n_inputs tensors.
    xs = jax.random.normal(kx, (n_inputs, B, C, H, W), dtype=jnp.float32)

    # Deterministic per-branch SE parameters (PyTorch Linear layout: [out, in]).
    w1 = 0.5 * jax.random.normal(k1, (n_inputs, Cr, C), dtype=jnp.float32)
    b1 = 0.1 * jax.random.normal(k2, (n_inputs, Cr), dtype=jnp.float32)
    w2 = 0.5 * jax.random.normal(k3, (n_inputs, C, Cr), dtype=jnp.float32)
    b2 = 0.1 * jax.random.normal(k4, (n_inputs, C), dtype=jnp.float32)

    out = fusion_module_forward(xs, w1, b1, w2, b2)
    out = jax.block_until_ready(out)

    ref = jax.block_until_ready(fusion_module_ref(xs, w1, b1, w2, b2))
    assert out.shape == (B, C, H, W)
    assert out.dtype == xs.dtype
    assert jnp.allclose(out.astype(jnp.float32), ref, atol=1e-5, rtol=1e-5), \
        "mismatch vs reference"

    print("KERNEL_OK")
</pallas_src>

<mosaic_0001>
module attributes {stable_mosaic.version = 11 : i64} {
  func.func @_se_fusion_kernel(%arg0: i32, %arg1: i32, %arg2: memref<1x2x4x256xf32, #tpu.memory_space<vmem>>, %arg3: memref<2x4x1xf32, #tpu.memory_space<vmem>>, %arg4: memref<2x1x1xf32, #tpu.memory_space<vmem>>, %arg5: memref<2x1x4xf32, #tpu.memory_space<vmem>>, %arg6: memref<2x1x4xf32, #tpu.memory_space<vmem>>, %arg7: memref<2x4x256xf32, #tpu.memory_space<vmem>>, %arg8: memref<2x4x256xf32, #tpu.memory_space<vmem>>) attributes {dimension_semantics = [#tpu.dimension_semantics<parallel>, #tpu.dimension_semantics<arbitrary>], iteration_bounds = array<i64: 1, 2>, scalar_prefetch = 0 : i64, scratch_operands = 1 : i64, tpu.core_type = #tpu.core_type<tc>, window_params = [{transform_indices = @transform_0, window_bounds = array<i64: 1, 2, 4, 256>}, {pipeline_mode = #tpu.pipeline_mode<synchronous>, transform_indices = @transform_1, window_bounds = array<i64: 2, 4, 1>}, {pipeline_mode = #tpu.pipeline_mode<synchronous>, transform_indices = @transform_2, window_bounds = array<i64: 2, 1, 1>}, {pipeline_mode = #tpu.pipeline_mode<synchronous>, transform_indices = @transform_3, window_bounds = array<i64: 2, 1, 4>}, {pipeline_mode = #tpu.pipeline_mode<synchronous>, transform_indices = @transform_4, window_bounds = array<i64: 2, 1, 4>}, {transform_indices = @transform_5, window_bounds = array<i64: 2, 4, 256>}]} {
    %c0 = arith.constant 0 : index
    %c0_0 = arith.constant 0 : index
    %c0_1 = arith.constant 0 : index
    %c0_2 = arith.constant 0 : index
    %0 = vector.load %arg2[%c0, %c0_0, %c0_1, %c0_2] : memref<1x2x4x256xf32, #tpu.memory_space<vmem>>, vector<1x2x4x256xf32>
    %1 = vector.shape_cast %0 : vector<1x2x4x256xf32> to vector<2x4x256xf32>
    %cst = arith.constant dense<0.000000e+00> : vector<2x4xf32>
    %2 = vector.multi_reduction <add>, %1, %cst [2] : vector<2x4x256xf32> to vector<2x4xf32>
    %cst_3 = arith.constant 2.560000e+02 : f32
    %3 = vector.broadcast %cst_3 : f32 to vector<2x4xf32>
    %4 = arith.divf %2, %3 : vector<2x4xf32>
    %5 = arith.index_cast %arg1 : i32 to index
    %c0_4 = arith.constant 0 : index
    %c0_5 = arith.constant 0 : index
    %6 = vector.load %arg3[%5, %c0_4, %c0_5] : memref<2x4x1xf32, #tpu.memory_space<vmem>>, vector<1x4x1xf32>
    %7 = vector.shape_cast %6 : vector<1x4x1xf32> to vector<4x1xf32>
    %cst_6 = arith.constant dense<0.000000e+00> : vector<2x1xf32>
    %8 = tpu.matmul %4, %7, %cst_6 {dimension_numbers = #tpu.dot_dimension_numbers<[1], [0], [0], [1], [0, 0, 1, 1], [], []>} : vector<2x4xf32>, vector<4x1xf32>, vector<2x1xf32> -> vector<2x1xf32>
    %9 = arith.index_cast %arg1 : i32 to index
    %c0_7 = arith.constant 0 : index
    %c0_8 = arith.constant 0 : index
    %10 = vector.load %arg4[%9, %c0_7, %c0_8] : memref<2x1x1xf32, #tpu.memory_space<vmem>>, vector<1x1x1xf32>
    %11 = vector.shape_cast %10 : vector<1x1x1xf32> to vector<1x1xf32>
    %12 = vector.broadcast %11 : vector<1x1xf32> to vector<2x1xf32>
    %13 = arith.addf %8, %12 : vector<2x1xf32>
    %cst_9 = arith.constant 0.000000e+00 : f32
    %14 = vector.broadcast %cst_9 : f32 to vector<2x1xf32>
    %15 = arith.maximumf %13, %14 : vector<2x1xf32>
    %16 = arith.index_cast %arg1 : i32 to index
    %c0_10 = arith.constant 0 : index
    %c0_11 = arith.constant 0 : index
    %17 = vector.load %arg5[%16, %c0_10, %c0_11] : memref<2x1x4xf32, #tpu.memory_space<vmem>>, vector<1x1x4xf32>
    %18 = vector.shape_cast %17 : vector<1x1x4xf32> to vector<1x4xf32>
    %cst_12 = arith.constant dense<0.000000e+00> : vector<2x4xf32>
    %19 = tpu.matmul %15, %18, %cst_12 {dimension_numbers = #tpu.dot_dimension_numbers<[1], [0], [0], [1], [0, 0, 1, 1], [], []>} : vector<2x1xf32>, vector<1x4xf32>, vector<2x4xf32> -> vector<2x4xf32>
    %20 = arith.index_cast %arg1 : i32 to index
    %c0_13 = arith.constant 0 : index
    %c0_14 = arith.constant 0 : index
    %21 = vector.load %arg6[%20, %c0_13, %c0_14] : memref<2x1x4xf32, #tpu.memory_space<vmem>>, vector<1x1x4xf32>
    %22 = vector.shape_cast %21 : vector<1x1x4xf32> to vector<1x4xf32>
    %23 = vector.broadcast %22 : vector<1x4xf32> to vector<2x4xf32>
    %24 = arith.addf %19, %23 : vector<2x4xf32>
    %25 = arith.negf %24 : vector<2x4xf32>
    %26 = math.exp %25 : vector<2x4xf32>
    %cst_15 = arith.constant 1.000000e+00 : f32
    %27 = vector.broadcast %cst_15 : f32 to vector<2x4xf32>
    %28 = arith.addf %27, %26 : vector<2x4xf32>
    %29 = arith.divf %27, %28 : vector<2x4xf32>
    %30 = vector.shape_cast %29 : vector<2x4xf32> to vector<2x4x1xf32>
    %31 = vector.broadcast %30 : vector<2x4x1xf32> to vector<2x4x256xf32>
    %32 = arith.mulf %1, %31 : vector<2x4x256xf32>
    %c0_i32 = arith.constant 0 : i32
    %33 = arith.cmpi eq, %arg1, %c0_i32 : i32
    %34 = arith.extui %33 : i1 to i32
    %c0_i32_16 = arith.constant 0 : i32
    %35 = arith.cmpi ne, %34, %c0_i32_16 : i32
    scf.if %35 {
      %c0_20 = arith.constant 0 : index
      %c0_21 = arith.constant 0 : index
      %c0_22 = arith.constant 0 : index
      %42 = vector.load %arg8[%c0_20, %c0_21, %c0_22] : memref<2x4x256xf32, #tpu.memory_space<vmem>>, vector<2x4x256xf32>
      tpu.vector_store %arg8[%c0_20, %c0_21, %c0_22], %32 {strides = array<i32>} : memref<2x4x256xf32, #tpu.memory_space<vmem>>, vector<2x4x256xf32>,
    } else {
    }
    %c0_i32_17 = arith.constant 0 : i32
    %36 = arith.cmpi sgt, %arg1, %c0_i32_17 : i32
    %37 = arith.extui %36 : i1 to i32
    %c0_i32_18 = arith.constant 0 : i32
    %38 = arith.cmpi ne, %37, %c0_i32_18 : i32
    scf.if %38 {
      %c0_20 = arith.constant 0 : index
      %c0_21 = arith.constant 0 : index
      %c0_22 = arith.constant 0 : index
      %42 = vector.load %arg8[%c0_20, %c0_21, %c0_22] : memref<2x4x256xf32, #tpu.memory_space<vmem>>, vector<2x4x256xf32>
      %43 = arith.addf %42, %32 : vector<2x4x256xf32>
      %c0_23 = arith.constant 0 : index
      %c0_24 = arith.constant 0 : index
      %c0_25 = arith.constant 0 : index
      %44 = vector.load %arg8[%c0_23, %c0_24, %c0_25] : memref<2x4x256xf32, #tpu.memory_space<vmem>>, vector<2x4x256xf32>
      tpu.vector_store %arg8[%c0_23, %c0_24, %c0_25], %43 {strides = array<i32>} : memref<2x4x256xf32, #tpu.memory_space<vmem>>, vector<2x4x256xf32>,
    } else {
    }
    %c1_i32 = arith.constant 1 : i32
    %39 = arith.cmpi eq, %arg1, %c1_i32 : i32
    %40 = arith.extui %39 : i1 to i32
    %c0_i32_19 = arith.constant 0 : i32
    %41 = arith.cmpi ne, %40, %c0_i32_19 : i32
    scf.if %41 {
      %c0_20 = arith.constant 0 : index
      %c0_21 = arith.constant 0 : index
      %c0_22 = arith.constant 0 : index
      %42 = vector.load %arg8[%c0_20, %c0_21, %c0_22] : memref<2x4x256xf32, #tpu.memory_space<vmem>>, vector<2x4x256xf32>
      %c0_23 = arith.constant 0 : index
      %c0_24 = arith.constant 0 : index
      %c0_25 = arith.constant 0 : index
      %43 = vector.load %arg7[%c0_23, %c0_24, %c0_25] : memref<2x4x256xf32, #tpu.memory_space<vmem>>, vector<2x4x256xf32>
      tpu.vector_store %arg7[%c0_23, %c0_24, %c0_25], %42 {strides = array<i32>} : memref<2x4x256xf32, #tpu.memory_space<vmem>>, vector<2x4x256xf32>,
    } else {
    }
    return
  }
  func.func @transform_0(%arg0: i32, %arg1: i32) -> (i32, i32, i32, i32) {
    %c0_i32 = arith.constant 0 : i32
    %c0_i32_0 = arith.constant 0 : i32
    %c0_i32_1 = arith.constant 0 : i32
    return %arg1, %arg0, %c0_i32, %c0_i32_0 : i32, i32, i32, i32
  }
  func.func @transform_1(%arg0: i32, %arg1: i32) -> (i32, i32, i32) {
    %c0_i32 = arith.constant 0 : i32
    %c0_i32_0 = arith.constant 0 : i32
    %c0_i32_1 = arith.constant 0 : i32
    %c0_i32_2 = arith.constant 0 : i32
    return %c0_i32, %c0_i32_0, %c0_i32_1 : i32, i32, i32
  }
  func.func @transform_2(%arg0: i32, %arg1: i32) -> (i32, i32, i32) {
    %c0_i32 = arith.constant 0 : i32
    %c0_i32_0 = arith.constant 0 : i32
    %c0_i32_1 = arith.constant 0 : i32
    %c0_i32_2 = arith.constant 0 : i32
    return %c0_i32, %c0_i32_0, %c0_i32_1 : i32, i32, i32
  }
  func.func @transform_3(%arg0: i32, %arg1: i32) -> (i32, i32, i32) {
    %c0_i32 = arith.constant 0 : i32
    %c0_i32_0 = arith.constant 0 : i32
    %c0_i32_1 = arith.constant 0 : i32
    %c0_i32_2 = arith.constant 0 : i32
    return %c0_i32, %c0_i32_0, %c0_i32_1 : i32, i32, i32
  }
  func.func @transform_4(%arg0: i32, %arg1: i32) -> (i32, i32, i32) {
    %c0_i32 = arith.constant 0 : i32
    %c0_i32_0 = arith.constant 0 : i32
    %c0_i32_1 = arith.constant 0 : i32
    %c0_i32_2 = arith.constant 0 : i32
    return %c0_i32, %c0_i32_0, %c0_i32_1 : i32, i32, i32
  }
  func.func @transform_5(%arg0: i32, %arg1: i32) -> (i32, i32, i32) {
    %c0_i32 = arith.constant 0 : i32
    %c0_i32_0 = arith.constant 0 : i32
    %c0_i32_1 = arith.constant 0 : i32
    return %arg0, %c0_i32, %c0_i32_0 : i32, i32, i32
  }
}

</mosaic_0001>

<llo_original>
// kernel: tpu_custom_call.1
$region0: #{tpu_custom_call.1}
  #allocation0 [shape = 'u32[]', space=smem, size = 0x4, offset = 0x4, fixed_abs, tag = 'smem constant byte address 0x4 - core index']
  #allocation1 [shape = 'u32[72,128]{1,0:T(1,128)}', space=vmem, size = 0x9000, scoped, tag = 'internal scratch']
  #allocation2 [shape = 'f32[2,4,256]{2,1,0:T(4,128)}', space=vmem, size = 0x2000, scoped, tag = 'scratch operand']
  %s0 = inlined_call_operand.hbm [shape: f32[2,2,4,256], index: 0, kind: input, shape index: {}]
  %s1 = inlined_call_operand.vmem [shape: f32[2,4,1], index: 1, kind: input, shape index: {}]
  %s2 = inlined_call_operand.vmem [shape: f32[2,1,1], index: 2, kind: input, shape index: {}]
  %s3 = inlined_call_operand.vmem [shape: f32[2,1,4], index: 3, kind: input, shape index: {}]
  %s4 = inlined_call_operand.vmem [shape: f32[2,1,4], index: 4, kind: input, shape index: {}]
  %s5 = inlined_call_operand.hbm [shape: f32[2,4,256], index: 5, kind: output, shape index: {}]
  %s6 = sld [smem:[#allocation0]]
  $region69: #{tpu_custom_call.1} parent=0
    _
  %s8 = ssub.s32 1, %s6
  %s9 = scalar_select 0, %s8, %s6
  $region1: #{tpu_custom_call.1} parent=0
    #allocation3 [shape = 'u8[16384]{0}', space=vmem, size = 0x4000, scoped, tag = 'input window, operand 0']
    #allocation4 [shape = 's32[2]{0}', space=sflag, size = 0x8, scoped, tag = 'scoped memory for tpu_custom_call.1']
    #allocation5 [shape = 's32[2]{0}', space=sflag, size = 0x8, scoped, tag = 'scoped memory for tpu_custom_call.1']
    #allocation6 [shape = 'u8[8192]{0}', space=vmem, size = 0x2000, scoped, tag = 'output window, operand 0, single buffered']
    %10 = vsyncpa [#allocation4], 0
    %s11 = scalar_lea.sflag [#allocation4], 1
    %12 = vsyncpa %s11, 0
    %13 = vsyncpa [#allocation5], 0
    loop: start=0, step=1, limit=4
    $region2: #{tpu_custom_call.1} parent=1 // loop_pre_header
      _
    $region3: #{tpu_custom_call.1} parent=1 // loop_header
      %s15 = sphi 0, %s19
      %p16 = scmp.ge.s32.totalorder %s15, 4
      %s22 = sphi 0, %s34
      %s23 = sphi 0, %s30
      %s24 = sphi 0, %s22
      %s25 = sphi 0, %s23
      %s26 = sphi 0, %s24
      %s27 = sphi 0, %s25
      %s39 = sphi 0, %s41
      %s42 = sphi 0, %s39
      %s43 = sphi 0, %s42
      %s59 = sphi 0, %s43
      %s63 = sphi 0, %s63
      %s65 = sphi 0, %s63
      %s66 = sphi 0, %s65
      %s80 = sphi 0, %s66
      %s84 = sphi 0, %s84
      %s86 = sphi 0, %s84
      %s87 = sphi 0, %s86
      %s101 = sphi 0, %s87
      %s105 = sphi 0, %s105
      %s107 = sphi 0, %s105
      %s108 = sphi 0, %s107
      %s122 = sphi 0, %s108
      %s126 = sphi 0, %s126
      %s128 = sphi 0, %s126
      %s129 = sphi 0, %s128
      %s143 = sphi 0, %s129
      %s149 = sphi 0, %s151
      %s152 = sphi 0, %s149
      %s153 = sphi 0, %s152
      %s169 = sphi 0, %s153
    $region4: #{tpu_custom_call.1} parent=1 // loop_header_branch
      %18 = sbr.rel (%p16) target = $region8
    $region5: #{tpu_custom_call.1} parent=1 // loop_body
      %s20 = ssub.s32 %s15, 1
      %s21 = ssub.s32 %s15, 2
      %s28 = sadd.s32 1, %s23
      %p29 = scmp.ge.s32.totalorder %s28, 2
      %s30 = scalar_select %p29, 0, %s28
      %s31 = sadd.s32 1, %s22
      %s32 = scalar_select %p29, %s31, %s22
      %p33 = scmp.ge.s32.totalorder %s32, 1
      %s34 = scalar_select %p33, 0, %s32
      %s35 = ssub.s32 %s23, %s30
      %s36 = ssub.s32 %s22, %s34
      %s37 = sor.u32 %s35, %s36
      %p38 = scmp.eq.s32.totalorder %s37, 0
      %s40 = sadd.s32 %s39, 1
      %s41 = scalar_select %p38, %s39, %s40
      %p44 = pneg %p38
      %p45 = scmp.eq.s32.totalorder %s15, 1
      %p46 = por %p44, %p45
      %p47 = scmp.ne.s32.totalorder %s39, %s42
      %p48 = scmp.eq.s32.totalorder %s15, 0
      %p49 = por %p47, %p48
      %p50 = scmp.ne.s32.totalorder %s39, %s42
      %p51 = scmp.eq.s32.totalorder %s20, 1
      %p52 = por %p50, %p51
      %p53 = scmp.ne.s32.totalorder %s42, %s43
      %p54 = scmp.eq.s32.totalorder %s20, 0
      %p55 = por %p53, %p54
      %p56 = scmp.ne.s32.totalorder %s42, %s43
      %p57 = scmp.eq.s32.totalorder %s21, 1
      %p58 = por %p56, %p57
      %p60 = scmp.ne.s32.totalorder %s43, %s59
      %p61 = scmp.eq.s32.totalorder %s21, 0
      %p62 = por %p60, %p61
      %s64 = sadd.s32 %s63, 1
      %p67 = scmp.eq.s32.totalorder %s15, 1
      %p68 = scmp.ne.s32.totalorder %s63, %s65
      %p69 = scmp.eq.s32.totalorder %s15, 0
      %p70 = por %p68, %p69
      %p71 = scmp.ne.s32.totalorder %s63, %s65
      %p72 = scmp.eq.s32.totalorder %s20, 1
      %p73 = por %p71, %p72
      %p74 = scmp.ne.s32.totalorder %s65, %s66
      %p75 = scmp.eq.s32.totalorder %s20, 0
      %p76 = por %p74, %p75
      %p77 = scmp.ne.s32.totalorder %s65, %s66
      %p78 = scmp.eq.s32.totalorder %s21, 1
      %p79 = por %p77, %p78
      %p81 = scmp.ne.s32.totalorder %s66, %s80
      %p82 = scmp.eq.s32.totalorder %s21, 0
      %p83 = por %p81, %p82
      %s85 = sadd.s32 %s84, 1
      %p88 = scmp.eq.s32.totalorder %s15, 1
      %p89 = scmp.ne.s32.totalorder %s84, %s86
      %p90 = scmp.eq.s32.totalorder %s15, 0
      %p91 = por %p89, %p90
      %p92 = scmp.ne.s32.totalorder %s84, %s86
      %p93 = scmp.eq.s32.totalorder %s20, 1
      %p94 = por %p92, %p93
      %p95 = scmp.ne.s32.totalorder %s86, %s87
      %p96 = scmp.eq.s32.totalorder %s20, 0
      %p97 = por %p95, %p96
      %p98 = scmp.ne.s32.totalorder %s86, %s87
      %p99 = scmp.eq.s32.totalorder %s21, 1
      %p100 = por %p98, %p99
      %p102 = scmp.ne.s32.totalorder %s87, %s101
      %p103 = scmp.eq.s32.totalorder %s21, 0
      %p104 = por %p102, %p103
      %s106 = sadd.s32 %s105, 1
      %p109 = scmp.eq.s32.totalorder %s15, 1
      %p110 = scmp.ne.s32.totalorder %s105, %s107
      %p111 = scmp.eq.s32.totalorder %s15, 0
      %p112 = por %p110, %p111
      %p113 = scmp.ne.s32.totalorder %s105, %s107
      %p114 = scmp.eq.s32.totalorder %s20, 1
      %p115 = por %p113, %p114
      %p116 = scmp.ne.s32.totalorder %s107, %s108
      %p117 = scmp.eq.s32.totalorder %s20, 0
      %p118 = por %p116, %p117
      %p119 = scmp.ne.s32.totalorder %s107, %s108
      %p120 = scmp.eq.s32.totalorder %s21, 1
      %p121 = por %p119, %p120
      %p123 = scmp.ne.s32.totalorder %s108, %s122
      %p124 = scmp.eq.s32.totalorder %s21, 0
      %p125 = por %p123, %p124
      %s127 = sadd.s32 %s126, 1
      %p130 = scmp.eq.s32.totalorder %s15, 1
      %p131 = scmp.ne.s32.totalorder %s126, %s128
      %p132 = scmp.eq.s32.totalorder %s15, 0
      %p133 = por %p131, %p132
      %p134 = scmp.ne.s32.totalorder %s126, %s128
      %p135 = scmp.eq.s32.totalorder %s20, 1
      %p136 = por %p134, %p135
      %p137 = scmp.ne.s32.totalorder %s128, %s129
      %p138 = scmp.eq.s32.totalorder %s20, 0
      %p139 = por %p137, %p138
      %p140 = scmp.ne.s32.totalorder %s128, %s129
      %p141 = scmp.eq.s32.totalorder %s21, 1
      %p142 = por %p140, %p141
      %p144 = scmp.ne.s32.totalorder %s129, %s143
      %p145 = scmp.eq.s32.totalorder %s21, 0
      %p146 = por %p144, %p145
      %s147 = ssub.s32 %s22, %s34
      %p148 = scmp.eq.s32.totalorder %s147, 0
      %s150 = sadd.s32 %s149, 1
      %s151 = scalar_select %p148, %s149, %s150
      %p154 = pneg %p148
      %p155 = scmp.eq.s32.totalorder %s15, 1
      %p156 = por %p154, %p155
      %p157 = scmp.ne.s32.totalorder %s149, %s152
      %p158 = scmp.eq.s32.totalorder %s15, 0
      %p159 = por %p157, %p158
      %p160 = scmp.ne.s32.totalorder %s149, %s152
      %p161 = scmp.eq.s32.totalorder %s20, 1
      %p162 = por %p160, %p161
      %p163 = scmp.ne.s32.totalorder %s152, %s153
      %p164 = scmp.eq.s32.totalorder %s20, 0
      %p165 = por %p163, %p164
      %p166 = scmp.ne.s32.totalorder %s152, %s153
      %p167 = scmp.eq.s32.totalorder %s21, 1
      %p168 = por %p166, %p167
      %p170 = scmp.ne.s32.totalorder %s153, %s169
      %p171 = scmp.eq.s32.totalorder %s21, 0
      %p172 = por %p170, %p171
      %p173 = scmp.le.s32.totalorder 1, %s15
      %p174 = scmp.lt.s32.totalorder %s15, 3
      %p175 = pnand %p173, %p174
      %p176 = pneg %p175
      // Predicated region
      $region9: #{tpu_custom_call.1} parent=5 // pred_check
        _
      $region10: #{tpu_custom_call.1} parent=5 // pred_check_branch
        %178 = sbr.rel (%p175) target = $region12
      $region11: #{tpu_custom_call.1} parent=5 // pred_region
        %s179 = ssub.s32 %s15, 1
        // Predicated region
        $region13: #{tpu_custom_call.1} parent=11 // pred_check
          %p180 = pneg %p76
        $region14: #{tpu_custom_call.1} parent=11 // pred_check_branch
          %182 = sbr.rel (%p180) target = $region16
        $region15: #{tpu_custom_call.1} parent=11 // pred_region
          _
        $region16: #{tpu_custom_call.1} parent=11 // pred_fallthru
          _
        // Predicated region
        $region17: #{tpu_custom_call.1} parent=11 // pred_check
          %p183 = pneg %p97
        $region18: #{tpu_custom_call.1} parent=11 // pred_check_branch
          %185 = sbr.rel (%p183) target = $region20
        $region19: #{tpu_custom_call.1} parent=11 // pred_region
          _
        $region20: #{tpu_custom_call.1} parent=11 // pred_fallthru
          _
        // Predicated region
        $region21: #{tpu_custom_call.1} parent=11 // pred_check
          %p186 = pneg %p118
        $region22: #{tpu_custom_call.1} parent=11 // pred_check_branch
          %188 = sbr.rel (%p186) target = $region24
        $region23: #{tpu_custom_call.1} parent=11 // pred_region
          _
        $region24: #{tpu_custom_call.1} parent=11 // pred_fallthru
          _
        // Predicated region
        $region25: #{tpu_custom_call.1} parent=11 // pred_check
          %p189 = pneg %p139
        $region26: #{tpu_custom_call.1} parent=11 // pred_check_branch
          %191 = sbr.rel (%p189) target = $region28
        $region27: #{tpu_custom_call.1} parent=11 // pred_region
          _
        $region28: #{tpu_custom_call.1} parent=11 // pred_fallthru
          _
      $region12: #{tpu_custom_call.1} parent=5 // pred_fallthru
        _
      %p192 = scmp.lt.s32.totalorder %s15, 2
      // Predicated region
      $region29: #{tpu_custom_call.1} parent=5 // pred_check
        %p193 = pneg %p192
      $region30: #{tpu_custom_call.1} parent=5 // pred_check_branch
        %195 = sbr.rel (%p193) target = $region32
      $region31: #{tpu_custom_call.1} parent=5 // pred_region
        // Predicated region
        $region33: #{tpu_custom_call.1} parent=31 // pred_check
          %p196 = pneg %p49
        $region34: #{tpu_custom_call.1} parent=31 // pred_check_branch
          %198 = sbr.rel (%p196) target = $region36
        $region35: #{tpu_custom_call.1} parent=31 // pred_region
          %s199 = sand.u32 %s39, 1
          %s200 = scalar_lea.sflag [#allocation4], %s199
          %s201 = sand.u32 %s39, 1
          %s202 = smul.addr %s201, 16
          %s203 = scalar_lea.vmem [#allocation3], %s202
          %s204 = smul.u32 2, %s22
          %206 = vsyncadd %s200, 0
          %s207 = smul.addr %s204, 2
          %s208 = smul.addr %s23, 4
          %s209 = sadd.s32 %s207, %s208
          %s210 = smul.addr %s209, 4
          %s211 = scalar_lea.hbm %s0, %s210
          %s212 = sshll.u32 %s211, 4
          %s213 = int_to_ptr.hbm [resolvable:$true] %s212
          %s214 = sshll.u32 %s203, 4
          %s215 = int_to_ptr.vmem [resolvable:$true] %s214
          %220 = dma.hbm_to_vmem [thread:$0]  %s213, 256, %s215, %s200, 128, 128, 8
        $region36: #{tpu_custom_call.1} parent=31 // pred_fallthru
          _
      $region32: #{tpu_custom_call.1} parent=5 // pred_fallthru
        _
      %p221 = scmp.le.s32.totalorder 1, %s15
      %p222 = scmp.lt.s32.totalorder %s15, 3
      %p223 = pnand %p221, %p222
      %p224 = pneg %p223
      // Predicated region
      $region37: #{tpu_custom_call.1} parent=5 // pred_check
        _
      $region38: #{tpu_custom_call.1} parent=5 // pred_check_branch
        %226 = sbr.rel (%p223) target = $region40
      $region39: #{tpu_custom_call.1} parent=5 // pred_region
        %s227 = ssub.s32 %s15, 1
        %s228 = sand.u32 %s42, 1
        %s229 = scalar_lea.sflag [#allocation4], %s228
        %s230 = sand.u32 %s42, 1
        %s231 = smul.addr %s230, 16
        %s232 = scalar_lea.vmem [#allocation3], %s231
        // Predicated region
        $region41: #{tpu_custom_call.1} parent=39 // pred_check
          %p233 = pneg %p55
        $region42: #{tpu_custom_call.1} parent=39 // pred_check_branch
          %235 = sbr.rel (%p233) target = $region44
        $region43: #{tpu_custom_call.1} parent=39 // pred_region
          %237 = dma.done %s229, 256
        $region44: #{tpu_custom_call.1} parent=39 // pred_fallthru
          _
        %s238 = sand.u32 %s42, 1
        %s239 = scalar_lea.sflag [#allocation4], %s238
        %s240 = sand.u32 %s42, 1
        %s241 = smul.addr %s240, 16
        %s242 = scalar_lea.vmem [#allocation3], %s241
        %p243 = pneg %p55
        %p244 = pneg %p52
        %p245 = pneg %p76
        %p246 = pneg %p73
        %p247 = pneg %p97
        %p248 = pneg %p94
        %p249 = pneg %p118
        %p250 = pneg %p115
        %p251 = pneg %p139
        %p252 = pneg %p136
        %p253 = pneg %p165
        %p254 = pneg %p162
        %s255 = smul.u32 2, %s24
        %s256 = smul.u32 2, %s24
        %v257 = vld [vmem:[%s232] sm:$0xff]
        %v258 = vld [vmem:[%s232 + $0x8] sm:$0xff]
        %261 = vst [vmem:[#allocation1] ss:$2 sm:$0xff] %v257
        %v262 = vld.sshfl [vmem:[#allocation1] sm:$0xff pattern:$0x75316420]
        %v263 = vld.sshfl [vmem:[#allocation1 + $0x8] sm:$0xff pattern:$0x75316420]
        %s264 = scalar_lea.vmem [#allocation1], 16
        %265 = vst [vmem:[%s264] ss:$2 sm:$0xff] %v258
        %v266 = vld.sshfl [vmem:[#allocation1 + $0x10] sm:$0xff pattern:$0x75316420]
        %v267 = vld.sshfl [vmem:[#allocation1 + $0x18] sm:$0xff pattern:$0x75316420]
        %vm272 = vcmask 1043456
        %v273 = vsel %vm272, %v262, 0.0
        %v274 = vsel %vm272, %v263, 0.0
        %v275 = vadd.f32 %v273, %v274
        %276 = vadd.xlane.f32.xlu0 %v275
        %v277 = vpop.xlane.xlu0 %276
        %v278 = vsel %vm272, %v266, 0.0
        %v279 = vsel %vm272, %v267, 0.0
        %v280 = vadd.f32 %v278, %v279
        %281 = vadd.xlane.f32.xlu0 %v280
        %v282 = vpop.xlane.xlu0 %281
        %v283 = vrcp.pop 256.0
        %v284 = vmul.f32 256.0, %v283
        %v285 = vsub.f32 1.0, %v284
        %v286 = vmul.f32 %v283, %v285
        %v287 = vadd.f32 %v283, %v286
        %vm288 = vweird.f32 %v283
        %v289 = vsel %vm288, %v283, %v287
        %v290 = vmul.f32 %v277, %v289
        %v291 = vmul.f32 %v282, %v289
        %s292 = smul.u32 %s25, 4
        %s293 = scalar_lea.vmem %s1, %s292
        %v294 = vld [vmem:[%s293] sm:$0xf]
        %s295 = scalar_lea.vmem %s2, %s25
        %v296 = vld [vmem:[%s295] sm:$0x1]
        %v298 = vperm.slane %v296, 0
        %v302 = vlaneseq
        %v303 = vand.u32 %v302, 127
        %v304 = vperm.slane %v290, %v303
        %v305 = vperm.slane %v291, %v303
        %vm306 = vcmask 1041409
        %v307 = vsel %vm306, %v305, %v304
        %vm308 = vcmask 31744
        %v309 = vsel %vm308, %v307, 0
        %v312 = vsel %vm272, %v294, 0
        %314 = vmatpush.msra.mxu0 0.0
        %315 = vmatpush.msra.mxu0 0.0
        %316 = vmatpush.msra.mxu0 0.0
        %317 = vmatpush.msra.mxu0 0.0
        %318 = vmatpush.msra.mxu0 0.0
        %319 = vmatpush.msra.mxu0 0.0
        %320 = vmatpush.msra.mxu0 0.0
        %321 = vmatpush.msra.mxu0 0.0
        %322 = vmatpush.msra.mxu0 0.0
        %323 = vmatpush.msra.mxu0 0.0
        %324 = vmatpush.msra.mxu0 0.0
        %325 = vmatpush.msra.mxu0 0.0
        %326 = vmatpush.msra.mxu0 0.0
        %327 = vmatpush.msra.mxu0 0.0
        %328 = vmatpush.msra.mxu0 0.0
        %329 = vmatpush.msra.mxu0 %v312
        %330 = vmatmul.f32.gmra.mxu0 %v309
        %v331 = vpop.f32.mrf.mxu0
        %v332 = vadd.f32 %v298, %v331
        %333 = vdwg.mxu0
        %v334 = vmax.f32 %v332, 0.0
        %s335 = scalar_lea.vmem %s3, %s25
        %v336 = vld [vmem:[%s335] sm:$0x1]
        %s337 = scalar_lea.vmem %s4, %s25
        %v338 = vld [vmem:[%s337] sm:$0x1]
        %v340 = vperm.slane %v338, 0
        %vm342 = vcmask 7168
        %v344 = vsel %vm342, %v334, 0
        %vm346 = vcmask 1040384
        %v348 = vsel %vm346, %v336, 0
        %350 = vmatpush.msra.mxu0 0.0
        %351 = vmatpush.msra.mxu0 0.0
        %352 = vmatpush.msra.mxu0 0.0
        %353 = vmatpush.msra.mxu0 0.0
        %354 = vmatpush.msra.mxu0 0.0
        %355 = vmatpush.msra.mxu0 0.0
        %356 = vmatpush.msra.mxu0 0.0
        %357 = vmatpush.msra.mxu0 0.0
        %358 = vmatpush.msra.mxu0 0.0
        %359 = vmatpush.msra.mxu0 0.0
        %360 = vmatpush.msra.mxu0 0.0
        %361 = vmatpush.msra.mxu0 0.0
        %362 = vmatpush.msra.mxu0 0.0
        %363 = vmatpush.msra.mxu0 0.0
        %364 = vmatpush.msra.mxu0 0.0
        %365 = vmatpush.msra.mxu0 %v348
        %366 = vmatmul.f32.gmra.mxu0 %v344
        %v367 = vpop.f32.mrf.mxu0
        %v368 = vadd.f32 %v340, %v367
        %369 = vdwg.mxu0
        %v370 = vxor.u32 %v368, 2147483648
        %v371 = vmul.f32 %v370, 1.442695
        %v372 = vpow.pop %v371
        %v373 = vadd.f32 %v372, 1.0
        %v374 = vrcp.pop %v373
        %v375 = vmul.f32 %v373, %v374
        %v376 = vsub.f32 1.0, %v375
        %v377 = vmul.f32 %v374, %v376
        %v378 = vadd.f32 %v374, %v377
        %vm379 = vweird.f32 %v373
        %vm380 = vweird.f32 %v374
        %vm381 = vmor %vm379, %vm380
        %v382 = vsel %vm381, %v374, %v378
        %v383 = vand.u32 2147483647, %v373
        %vm384 = vcmp.eq.f32.partialorder %v383, 8.507059e+37
        %v385 = vand.u32 %v373, 2147483648
        %v386 = vor.u32 1.1754944e-38, %v385
        %v387 = vsel %vm384, %v386, %v382
        %v388 = vmul.f32 1.0, %v387
        %v389 = vperm.slane %v388, 0
        %v390 = vlaneseq
        %v391 = vshrl.u32 %v390, 7
        %393 = vset.pattern.permute.xlu0 %v391
        %394 = vperm.xlu0 %393, %v389
        %v395 = vpop.permute.xlu0 %394
        %v396 = vperm.slane %v388, 1
        %v397 = vlaneseq
        %v398 = vshrl.u32 %v397, 7
        %400 = vset.pattern.permute.xlu0 %v398
        %401 = vperm.xlu0 %400, %v396
        %v402 = vpop.permute.xlu0 %401
        %v406 = vunpack.c.l.s4 839922192
        %v407 = vunpack.c.0.s8 %v406
        %v408 = vperm.slane %v395, %v407
        %v410 = vunpack.c.l.s4 839922192
        %v411 = vunpack.c.0.s8 %v410
        %v412 = vperm.slane %v402, %v411
        %v415 = vmul.f32 %v257, %v408
        %v416 = vmul.f32 %v258, %v412
        %p417 = scmp.eq.s32.totalorder %s25, 0
        // Predicated region
        $region45: #{tpu_custom_call.1} parent=39 // pred_check
          %p418 = pneg %p417
        $region46: #{tpu_custom_call.1} parent=39 // pred_check_branch
          %420 = sbr.rel (%p418) target = $region48
        $region47: #{tpu_custom_call.1} parent=39 // pred_region
          %421 = vst [vmem:[#allocation2] sm:$0xff] %v415
          %422 = vst [vmem:[#allocation2 + $0x8] sm:$0xff] %v416
        $region48: #{tpu_custom_call.1} parent=39 // pred_fallthru
          _
        %p423 = scmp.gt.s32.totalorder %s25, 0
        // Predicated region
        $region49: #{tpu_custom_call.1} parent=39 // pred_check
          %p424 = pneg %p423
        $region50: #{tpu_custom_call.1} parent=39 // pred_check_branch
          %426 = sbr.rel (%p424) target = $region52
        $region51: #{tpu_custom_call.1} parent=39 // pred_region
          %v427 = vld [vmem:[#allocation2] sm:$0xff]
          %v428 = vld [vmem:[#allocation2 + $0x8] sm:$0xff]
          %v429 = vadd.f32 %v427, %v415
          %v430 = vadd.f32 %v428, %v416
          %431 = vst [vmem:[#allocation2] sm:$0xff] %v429
          %432 = vst [vmem:[#allocation2 + $0x8] sm:$0xff] %v430
        $region52: #{tpu_custom_call.1} parent=39 // pred_fallthru
          _
        %p433 = scmp.eq.s32.totalorder %s25, 1
        // Predicated region
        $region53: #{tpu_custom_call.1} parent=39 // pred_check
          %p434 = pneg %p433
        $region54: #{tpu_custom_call.1} parent=39 // pred_check_branch
          %436 = sbr.rel (%p434) target = $region56
        $region55: #{tpu_custom_call.1} parent=39 // pred_region
          %v437 = vld [vmem:[#allocation2] sm:$0xff]
          %v438 = vld [vmem:[#allocation2 + $0x8] sm:$0xff]
          %439 = vst [vmem:[#allocation6] sm:$0xff] %v437
          %440 = vst [vmem:[#allocation6 + $0x8] sm:$0xff] %v438
        $region56: #{tpu_custom_call.1} parent=39 // pred_fallthru
          _
        // Predicated region
        $region57: #{tpu_custom_call.1} parent=39 // pred_check
          %p441 = pneg %p162
        $region58: #{tpu_custom_call.1} parent=39 // pred_check_branch
          %443 = sbr.rel (%p441) target = $region60
        $region59: #{tpu_custom_call.1} parent=39 // pred_region
          %s444 = smul.u32 2, %s24
          %446 = vsyncadd [#allocation5], 0
          %s447 = smul.addr %s444, 2
          %s448 = smul.addr %s447, 4
          %s449 = scalar_lea.hbm %s5, %s448
          %s450 = sshll.u32 [#allocation6], 4
          %s451 = int_to_ptr.vmem [resolvable:$true] %s450
          %s452 = sshll.u32 %s449, 4
          %s453 = int_to_ptr.hbm [resolvable:$true] %s452
          %458 = dma.vmem_to_hbm [thread:$0]  %s451, 256, %s453, [#allocation5], 128, 128, 8
        $region60: #{tpu_custom_call.1} parent=39 // pred_fallthru
          _
        // Predicated region
        $region61: #{tpu_custom_call.1} parent=39 // pred_check
          %p459 = pneg %p162
        $region62: #{tpu_custom_call.1} parent=39 // pred_check_branch
          %461 = sbr.rel (%p459) target = $region64
        $region63: #{tpu_custom_call.1} parent=39 // pred_region
          %463 = dma.done [#allocation5], 256
        $region64: #{tpu_custom_call.1} parent=39 // pred_fallthru
          _
      $region40: #{tpu_custom_call.1} parent=5 // pred_fallthru
        _
      %p464 = scmp.le.s32.totalorder 2, %s15
      // Predicated region
      $region65: #{tpu_custom_call.1} parent=5 // pred_check
        %p465 = pneg %p464
      $region66: #{tpu_custom_call.1} parent=5 // pred_check_branch
        %467 = sbr.rel (%p465) target = $region68
      $region67: #{tpu_custom_call.1} parent=5 // pred_region
        %s468 = ssub.s32 %s15, 2
      $region68: #{tpu_custom_call.1} parent=5 // pred_fallthru
        _
    $region6: #{tpu_custom_call.1} parent=1 // loop_footer
      %s19 = sadd.s32 1, %s15
    $region7: #{tpu_custom_call.1} parent=1 // loop_footer_branch
      %14 = sbr.rel target = $region3
    $region8: #{tpu_custom_call.1} parent=1 // loop_exit
      _
    %469 = vsyncpa [#allocation4], 1
    %s470 = scalar_lea.sflag [#allocation4], 1
    %471 = vsyncpa %s470, 1
    %472 = vsyncpa [#allocation5], 1
    %s473 = scalar_lea.sflag [#allocation5], 1
    %474 = vsyncpa %s473, 1

</llo_original>
